<compile_context>
chip_gen: v6e
topology: v6e:2x2x1
jax: 0.10.0
libtpu: 0.0.40
codegen_flags: <defaults>
</compile_context>

<pallas_src>
import jax
import jax.numpy as jnp
from jax.experimental import pallas as pl
from jax.experimental.pallas import tpu as pltpu

_LANE = 128
_BN_EPS = 1e-5


def _round_up(n, m):
    return ((n + m - 1) // m) * m


def _full_spec(shape):
    # Whole array as a single VMEM block (block_shape == array shape is always legal,
    # even when the last dims are not (8,128)-aligned).
    return pl.BlockSpec(shape, lambda: tuple(0 for _ in shape))


# ----------------------------- fused Pallas kernel ---------------------------

def _make_fused_mlp_kernel(kinds, real_n):
    """Build the fused kernel body.

    kinds: tuple of "bn_relu" | "relu" | "linear" (one entry per Linear layer, in order).
    real_n: real (unpadded) batch size -- static, used for BN stats and row masking.
    Parameter ref order per layer:
      "bn_relu": (w_t, gamma, beta)    -- Linear bias dropped (cancelled by BN mean sub)
      "relu"   : (w_t, b)
      "linear" : (w_t, b)
    """

    def kernel(*refs):
        x_ref = refs[0]
        o_ref = refs[-1]
        params = refs[1:-1]

        h = x_ref[...].astype(jnp.float32)       # (n_pad, in_feat), stays in VMEM/vregs
        n_pad = h.shape[0]
        need_mask = (n_pad != real_n)
        inv_n = 1.0 / real_n

        def row_mask(shape):
            rows = jax.lax.broadcasted_iota(jnp.int32, shape, 0)
            return (rows < real_n).astype(jnp.float32)

        p = 0
        for kind in kinds:
            w = params[p][...]                    # (K, out_pad), possibly bf16
            if kind == "bn_relu":
                gamma = params[p + 1][...]        # (1, out_pad) f32
                beta = params[p + 2][...]         # (1, out_pad) f32
                p += 3
                y = jnp.dot(h.astype(w.dtype), w,
                            preferred_element_type=jnp.float32)
                # Padded rows of h are zero, so they contribute nothing to the sum;
                # inv_n divides by the REAL batch size.
                mean = jnp.sum(y, axis=0, keepdims=True) * inv_n
                d = y - mean                       # two-pass variance: no cancellation
                if need_mask:
                    d = d * row_mask(d.shape)      # keep padded rows out of the stats
                var = jnp.sum(d * d, axis=0, keepdims=True) * inv_n
                scale = gamma * jax.lax.rsqrt(var + _BN_EPS)   # gamma folded; EUP rsqrt
                h = jnp.maximum(d * scale + beta, 0.0)
                if need_mask:
                    h = h * row_mask(h.shape)      # padded rows back to zero
            elif kind == "relu":
                b = params[p + 1][...]
                p += 2
                h = jnp.maximum(jnp.dot(h.astype(w.dtype), w,
                                        preferred_element_type=jnp.float32) + b, 0.0)
                if need_mask:
                    h = h * row_mask(h.shape)
            else:  # final "linear"
                b = params[p + 1][...]
                p += 2
                h = jnp.dot(h.astype(w.dtype), w,
                            preferred_element_type=jnp.float32) + b
        o_ref[...] = h.astype(o_ref.dtype)

    return kernel


# ----------------------------- MLP wrapper -----------------------------------

class MLPPallas:
    def __init__(self, input_size, arch, output_size, batch_norm=True, init_w=0.02,
                 discriminator=False, param_dtype=jnp.bfloat16, key=None):
        if key is None:
            key = jax.random.PRNGKey(0)
        if isinstance(arch, int):
            arch = str(arch)
        sizes = [input_size] + [int(s) for s in arch.split('-')]

        self.input_size = input_size
        self.output_size = output_size
        self.param_dtype = jnp.dtype(param_dtype)
        self.out_pad = _round_up(output_size, _LANE)
        self._max_width = max([input_size, self.out_pad]
                              + [_round_up(s, _LANE) for s in sizes[1:]])

        self.kinds = []        # per-Linear-layer kind, kernel order
        self.params = []       # flat list of parameter arrays, kernel order
        self._ref_layers = []  # unpadded f32 params for the pure-JAX reference

        keys = jax.random.split(key, len(sizes) + 1)
        for i in range(len(sizes) - 1):
            fan_in, fan_out = sizes[i], sizes[i + 1]
            # First layer contracts over the REAL input width (x is passed unpadded);
            # later layers contract over the previous layer's lane-padded width.
            k_dim = fan_in if i == 0 else _round_up(fan_in, _LANE)
            out_p = _round_up(fan_out, _LANE)
            kw, kg = jax.random.split(keys[i])
            w = init_w * jax.random.normal(kw, (fan_out, fan_in), jnp.float32)
            w_t_pad = jnp.zeros((k_dim, out_p), jnp.float32).at[:fan_in, :fan_out].set(w.T)
            use_bn = batch_norm and (not (discriminator and i == 0))

            ref = {"w_t": w.T, "b": jnp.zeros((1, fan_out), jnp.float32), "use_bn": use_bn}
            if use_bn:
                # init_weights() also re-inits BN params: gamma ~ N(0, init_w), beta = 0
                gamma = init_w * jax.random.normal(kg, (1, fan_out), jnp.float32)
                gamma_pad = jnp.zeros((1, out_p), jnp.float32).at[:, :fan_out].set(gamma)
                beta_pad = jnp.zeros((1, out_p), jnp.float32)
                self.kinds.append("bn_relu")
                self.params += [w_t_pad.astype(self.param_dtype), gamma_pad, beta_pad]
                ref["gamma"] = gamma
                ref["beta"] = jnp.zeros((1, fan_out), jnp.float32)
            else:
                bias_pad = jnp.zeros((1, out_p), jnp.float32)
                self.kinds.append("relu")
                self.params += [w_t_pad.astype(self.param_dtype), bias_pad]
            self._ref_layers.append(ref)

        # final output Linear
        fan_in = sizes[-1]
        k_dim = _round_up(fan_in, _LANE)
        kw_out, _ = jax.random.split(keys[-1])
        w_out = init_w * jax.random.normal(kw_out, (output_size, fan_in), jnp.float32)
        w_out_t_pad = (jnp.zeros((k_dim, self.out_pad), jnp.float32)
                       .at[:fan_in, :output_size].set(w_out.T))
        b_out_pad = jnp.zeros((1, self.out_pad), jnp.float32)
        self.kinds.append("linear")
        self.params += [w_out_t_pad.astype(self.param_dtype), b_out_pad]
        self._ref_out = {"w_t": w_out.T, "b": jnp.zeros((1, output_size), jnp.float32)}

        self.kinds = tuple(self.kinds)

    def __call__(self, x):
        orig_3d = (x.ndim == 3)
        if orig_3d:
            s1, s2, s3 = x.shape
            x = x.reshape(s1 * s2, s3)
        n, f = x.shape
        assert f == self.input_size

        x_in = x.astype(jnp.float32)
        # Pad only the batch dim to a sublane multiple (8 f32 / 16 when LHS is cast to
        # bf16); padded rows are masked out of BN stats inside the kernel.  No-op when
        # n is already aligned.  The feature dim is NOT padded (no wrapper round trip).
        sub = 16 if self.param_dtype == jnp.dtype(jnp.bfloat16) else 8
        n_pad = _round_up(n, sub)
        if n_pad != n:
            x_in = jnp.pad(x_in, ((0, n_pad - n), (0, 0)))

        kernel = _make_fused_mlp_kernel(self.kinds, n)

        # Scoped-VMEM budget sized to the actual resident footprint (+2x margin),
        # capped at v7x physical VMEM (64 MiB).
        param_bytes = sum(int(p.size) * p.dtype.itemsize for p in self.params)
        io_bytes = (n_pad * f + n_pad * self.out_pad) * 4
        act_bytes = 3 * n_pad * self._max_width * 4
        vmem_limit = int(min(64 << 20,
                             max(2 * (param_bytes + io_bytes + act_bytes) + (2 << 20),
                                 16 << 20)))

        out_p = pl.pallas_call(
            kernel,
            out_shape=jax.ShapeDtypeStruct((n_pad, self.out_pad), jnp.float32),
            in_specs=[_full_spec(x_in.shape)] + [_full_spec(p.shape) for p in self.params],
            out_specs=_full_spec((n_pad, self.out_pad)),
            compiler_params=pltpu.CompilerParams(vmem_limit_bytes=vmem_limit),
        )(x_in, *self.params)

        out = out_p[:n, :self.output_size]
        if orig_3d:
            out = out.reshape(s1, s2, -1)
        return out

    # Pure-JAX reference (unpadded, f32) for correctness checking.
    def reference(self, x):
        orig_3d = (x.ndim == 3)
        if orig_3d:
            s1, s2, s3 = x.shape
            x = x.reshape(s1 * s2, s3)
        x = x.astype(jnp.float32)
        for layer in self._ref_layers:
            y = x @ layer["w_t"] + layer["b"]
            if layer["use_bn"]:
                mean = jnp.mean(y, axis=0, keepdims=True)
                var = jnp.mean((y - mean) ** 2, axis=0, keepdims=True)
                y = (y - mean) / jnp.sqrt(var + _BN_EPS)
                y = y * layer["gamma"] + layer["beta"]
            x = jnp.maximum(y, 0.0)
        x = x @ self._ref_out["w_t"] + self._ref_out["b"]
        if orig_3d:
            x = x.reshape(s1, s2, -1)
        return x


if __name__ == "__main__":
    key = jax.random.PRNGKey(0)
    k_param, k_disc, k_x = jax.random.split(key, 3)

    input_size, arch, output_size = 32, "64-32", 16
    x3 = jax.random.normal(k_x, (4, 8, input_size), jnp.float32)

    # 1) f32-weight model, 3-D input (exercises the view/flatten path): strict check.
    mlp_f32 = MLPPallas(input_size, arch, output_size, batch_norm=True, init_w=0.02,
                        discriminator=False, param_dtype=jnp.float32, key=k_param)
    out = mlp_f32(x3)
    jax.block_until_ready(out)
    ref = mlp_f32.reference(x3)
    assert out.shape == (4, 8, output_size), out.shape
    assert jnp.allclose(out, ref, atol=1e-4, rtol=1e-3), \
        float(jnp.max(jnp.abs(out - ref)))

    # 2) ragged batch (N=12 -> padded to 16): exercises the BN row-mask path.
    x_rag = jax.random.normal(jax.random.fold_in(k_x, 2), (12, input_size), jnp.float32)
    out_r = mlp_f32(x_rag)
    jax.block_until_ready(out_r)
    ref_r = mlp_f32.reference(x_rag)
    assert out_r.shape == (12, output_size), out_r.shape
    assert jnp.allclose(out_r, ref_r, atol=1e-4, rtol=1e-3), \
        float(jnp.max(jnp.abs(out_r - ref_r)))

    # 3) discriminator variant (no BN on first layer), 2-D input, f32 weights.
    disc = MLPPallas(32, "64", 1, batch_norm=True, init_w=0.02,
                     discriminator=True, param_dtype=jnp.float32, key=k_disc)
    x2 = jax.random.normal(jax.random.fold_in(k_x, 1), (16, 32), jnp.float32)
    out_d = disc(x2)
    jax.block_until_ready(out_d)
    ref_d = disc.reference(x2)
    assert out_d.shape == (16, 1), out_d.shape
    assert jnp.allclose(out_d, ref_d, atol=1e-4, rtol=1e-3)

    # 4) default bf16 matmul operands (f32 accumulation, f32 BN/ReLU math):
    #    numerically checked against the unquantized f32 reference.
    mlp_bf16 = MLPPallas(input_size, arch, output_size, batch_norm=True, init_w=0.02,
                         discriminator=False, key=k_param)
    out_bf16 = mlp_bf16(x3)
    jax.block_until_ready(out_bf16)
    ref_bf16 = mlp_bf16.reference(x3)
    assert out_bf16.shape == (4, 8, output_size)
    assert jnp.allclose(out_bf16, ref_bf16, atol=3e-3, rtol=5e-2), \
        float(jnp.max(jnp.abs(out_bf16 - ref_bf16)))

    print("KERNEL_OK")
</pallas_src>

<mosaic_0001>
module attributes {stable_mosaic.version = 11 : i64} {
  func.func @kernel(%arg0: memref<32x32xf32, #tpu.memory_space<vmem>>, %arg1: memref<32x128xf32, #tpu.memory_space<vmem>>, %arg2: memref<1x128xf32, #tpu.memory_space<vmem>>, %arg3: memref<1x128xf32, #tpu.memory_space<vmem>>, %arg4: memref<128x128xf32, #tpu.memory_space<vmem>>, %arg5: memref<1x128xf32, #tpu.memory_space<vmem>>, %arg6: memref<1x128xf32, #tpu.memory_space<vmem>>, %arg7: memref<128x128xf32, #tpu.memory_space<vmem>>, %arg8: memref<1x128xf32, #tpu.memory_space<vmem>>, %arg9: memref<32x128xf32, #tpu.memory_space<vmem>>) attributes {dimension_semantics = [], scalar_prefetch = 0 : i64, scratch_operands = 0 : i64, tpu.core_type = #tpu.core_type<tc>} {
    %c0 = arith.constant 0 : index
    %c0_0 = arith.constant 0 : index
    %0 = vector.load %arg0[%c0, %c0_0] : memref<32x32xf32, #tpu.memory_space<vmem>>, vector<32x32xf32>
    %c0_1 = arith.constant 0 : index
    %c0_2 = arith.constant 0 : index
    %1 = vector.load %arg1[%c0_1, %c0_2] : memref<32x128xf32, #tpu.memory_space<vmem>>, vector<32x128xf32>
    %c0_3 = arith.constant 0 : index
    %c0_4 = arith.constant 0 : index
    %2 = vector.load %arg2[%c0_3, %c0_4] : memref<1x128xf32, #tpu.memory_space<vmem>>, vector<1x128xf32>
    %c0_5 = arith.constant 0 : index
    %c0_6 = arith.constant 0 : index
    %3 = vector.load %arg3[%c0_5, %c0_6] : memref<1x128xf32, #tpu.memory_space<vmem>>, vector<1x128xf32>
    %cst = arith.constant dense<0.000000e+00> : vector<32x128xf32>
    %4 = tpu.matmul %0, %1, %cst {dimension_numbers = #tpu.dot_dimension_numbers<[1], [0], [0], [1], [0, 0, 1, 1], [], []>} : vector<32x32xf32>, vector<32x128xf32>, vector<32x128xf32> -> vector<32x128xf32>
    %cst_7 = arith.constant dense<0.000000e+00> : vector<128xf32>
    %5 = vector.multi_reduction <add>, %4, %cst_7 [0] : vector<32x128xf32> to vector<128xf32>
    %6 = vector.shape_cast %5 : vector<128xf32> to vector<1x128xf32>
    %cst_8 = arith.constant 3.125000e-02 : f32
    %7 = vector.broadcast %cst_8 : f32 to vector<1x128xf32>
    %8 = arith.mulf %6, %7 : vector<1x128xf32>
    %9 = vector.broadcast %8 : vector<1x128xf32> to vector<32x128xf32>
    %10 = arith.subf %4, %9 : vector<32x128xf32>
    %11 = arith.mulf %10, %10 : vector<32x128xf32>
    %cst_9 = arith.constant dense<0.000000e+00> : vector<128xf32>
    %12 = vector.multi_reduction <add>, %11, %cst_9 [0] : vector<32x128xf32> to vector<128xf32>
    %13 = vector.shape_cast %12 : vector<128xf32> to vector<1x128xf32>
    %cst_10 = arith.constant 3.125000e-02 : f32
    %14 = vector.broadcast %cst_10 : f32 to vector<1x128xf32>
    %15 = arith.mulf %13, %14 : vector<1x128xf32>
    %cst_11 = arith.constant 9.99999974E-6 : f32
    %16 = vector.broadcast %cst_11 : f32 to vector<1x128xf32>
    %17 = arith.addf %15, %16 : vector<1x128xf32>
    %18 = math.rsqrt %17 : vector<1x128xf32>
    %19 = arith.mulf %2, %18 : vector<1x128xf32>
    %20 = vector.broadcast %19 : vector<1x128xf32> to vector<32x128xf32>
    %21 = arith.mulf %10, %20 : vector<32x128xf32>
    %22 = vector.broadcast %3 : vector<1x128xf32> to vector<32x128xf32>
    %23 = arith.addf %21, %22 : vector<32x128xf32>
    %cst_12 = arith.constant 0.000000e+00 : f32
    %24 = vector.broadcast %cst_12 : f32 to vector<32x128xf32>
    %25 = arith.maximumf %23, %24 : vector<32x128xf32>
    %c0_13 = arith.constant 0 : index
    %c0_14 = arith.constant 0 : index
    %26 = vector.load %arg4[%c0_13, %c0_14] : memref<128x128xf32, #tpu.memory_space<vmem>>, vector<128x128xf32>
    %c0_15 = arith.constant 0 : index
    %c0_16 = arith.constant 0 : index
    %27 = vector.load %arg5[%c0_15, %c0_16] : memref<1x128xf32, #tpu.memory_space<vmem>>, vector<1x128xf32>
    %c0_17 = arith.constant 0 : index
    %c0_18 = arith.constant 0 : index
    %28 = vector.load %arg6[%c0_17, %c0_18] : memref<1x128xf32, #tpu.memory_space<vmem>>, vector<1x128xf32>
    %cst_19 = arith.constant dense<0.000000e+00> : vector<32x128xf32>
    %29 = tpu.matmul %25, %26, %cst_19 {dimension_numbers = #tpu.dot_dimension_numbers<[1], [0], [0], [1], [0, 0, 1, 1], [], []>} : vector<32x128xf32>, vector<128x128xf32>, vector<32x128xf32> -> vector<32x128xf32>
    %cst_20 = arith.constant dense<0.000000e+00> : vector<128xf32>
    %30 = vector.multi_reduction <add>, %29, %cst_20 [0] : vector<32x128xf32> to vector<128xf32>
    %31 = vector.shape_cast %30 : vector<128xf32> to vector<1x128xf32>
    %cst_21 = arith.constant 3.125000e-02 : f32
    %32 = vector.broadcast %cst_21 : f32 to vector<1x128xf32>
    %33 = arith.mulf %31, %32 : vector<1x128xf32>
    %34 = vector.broadcast %33 : vector<1x128xf32> to vector<32x128xf32>
    %35 = arith.subf %29, %34 : vector<32x128xf32>
    %36 = arith.mulf %35, %35 : vector<32x128xf32>
    %cst_22 = arith.constant dense<0.000000e+00> : vector<128xf32>
    %37 = vector.multi_reduction <add>, %36, %cst_22 [0] : vector<32x128xf32> to vector<128xf32>
    %38 = vector.shape_cast %37 : vector<128xf32> to vector<1x128xf32>
    %cst_23 = arith.constant 3.125000e-02 : f32
    %39 = vector.broadcast %cst_23 : f32 to vector<1x128xf32>
    %40 = arith.mulf %38, %39 : vector<1x128xf32>
    %cst_24 = arith.constant 9.99999974E-6 : f32
    %41 = vector.broadcast %cst_24 : f32 to vector<1x128xf32>
    %42 = arith.addf %40, %41 : vector<1x128xf32>
    %43 = math.rsqrt %42 : vector<1x128xf32>
    %44 = arith.mulf %27, %43 : vector<1x128xf32>
    %45 = vector.broadcast %44 : vector<1x128xf32> to vector<32x128xf32>
    %46 = arith.mulf %35, %45 : vector<32x128xf32>
    %47 = vector.broadcast %28 : vector<1x128xf32> to vector<32x128xf32>
    %48 = arith.addf %46, %47 : vector<32x128xf32>
    %cst_25 = arith.constant 0.000000e+00 : f32
    %49 = vector.broadcast %cst_25 : f32 to vector<32x128xf32>
    %50 = arith.maximumf %48, %49 : vector<32x128xf32>
    %c0_26 = arith.constant 0 : index
    %c0_27 = arith.constant 0 : index
    %51 = vector.load %arg7[%c0_26, %c0_27] : memref<128x128xf32, #tpu.memory_space<vmem>>, vector<128x128xf32>
    %c0_28 = arith.constant 0 : index
    %c0_29 = arith.constant 0 : index
    %52 = vector.load %arg8[%c0_28, %c0_29] : memref<1x128xf32, #tpu.memory_space<vmem>>, vector<1x128xf32>
    %cst_30 = arith.constant dense<0.000000e+00> : vector<32x128xf32>
    %53 = tpu.matmul %50, %51, %cst_30 {dimension_numbers = #tpu.dot_dimension_numbers<[1], [0], [0], [1], [0, 0, 1, 1], [], []>} : vector<32x128xf32>, vector<128x128xf32>, vector<32x128xf32> -> vector<32x128xf32>
    %54 = vector.broadcast %52 : vector<1x128xf32> to vector<32x128xf32>
    %55 = arith.addf %53, %54 : vector<32x128xf32>
    %c0_31 = arith.constant 0 : index
    %c0_32 = arith.constant 0 : index
    %56 = vector.load %arg9[%c0_31, %c0_32] : memref<32x128xf32, #tpu.memory_space<vmem>>, vector<32x128xf32>
    tpu.vector_store %arg9[%c0_31, %c0_32], %55 {strides = array<i32>} : memref<32x128xf32, #tpu.memory_space<vmem>>, vector<32x128xf32>,
    return
  }
}

</mosaic_0001>

<llo_original>
// kernel: tpu_custom_call.1
$region0: #{tpu_custom_call.1}
  #allocation0 [shape = 'u32[]', space=smem, size = 0x4, offset = 0x4, fixed_abs, tag = 'smem constant byte address 0x4 - core index']
  #allocation1 [shape = 'u32[144,128]{1,0:T(1,128)}', space=vmem, size = 0x12000, scoped, tag = 'internal scratch']
  %s0 = inlined_call_operand.hbm [shape: f32[32,32], index: 0, kind: input, shape index: {}]
  %s1 = inlined_call_operand.hbm [shape: f32[32,128], index: 1, kind: input, shape index: {}]
  %s2 = inlined_call_operand.vmem [shape: f32[1,128], index: 2, kind: input, shape index: {}]
  %s3 = inlined_call_operand.vmem [shape: f32[1,128], index: 3, kind: input, shape index: {}]
  %s4 = inlined_call_operand.hbm [shape: f32[128,128], index: 4, kind: input, shape index: {}]
  %s5 = inlined_call_operand.vmem [shape: f32[1,128], index: 5, kind: input, shape index: {}]
  %s6 = inlined_call_operand.vmem [shape: f32[1,128], index: 6, kind: input, shape index: {}]
  %s7 = inlined_call_operand.hbm [shape: f32[128,128], index: 7, kind: input, shape index: {}]
  %s8 = inlined_call_operand.vmem [shape: f32[1,128], index: 8, kind: input, shape index: {}]
  %s9 = inlined_call_operand.hbm [shape: f32[32,128], index: 9, kind: output, shape index: {}]
  %s10 = sld [smem:[#allocation0]]
  $region62: #{tpu_custom_call.1} parent=0
    _
  %s12 = ssub.s32 1, %s10
  %s13 = scalar_select 0, %s12, %s10
  $region1: #{tpu_custom_call.1} parent=0
    #allocation2 [shape = 'u8[16384]{0}', space=vmem, size = 0x4000, scoped, tag = 'input window, operand 0, single buffered']
    #allocation3 [shape = 's32[1]{0}', space=sflag, size = 0x4, scoped, tag = 'scoped memory for tpu_custom_call.1']
    #allocation4 [shape = 's32[1]{0}', space=sflag, size = 0x4, scoped, tag = 'scoped memory for tpu_custom_call.1']
    #allocation5 [shape = 'u8[16384]{0}', space=vmem, size = 0x4000, scoped, tag = 'input window, operand 1, single buffered']
    #allocation6 [shape = 's32[1]{0}', space=sflag, size = 0x4, scoped, tag = 'scoped memory for tpu_custom_call.1']
    #allocation7 [shape = 'u8[65536]{0}', space=vmem, size = 0x10000, scoped, tag = 'input window, operand 4, single buffered']
    #allocation8 [shape = 'u8[65536]{0}', space=vmem, size = 0x10000, scoped, tag = 'input window, operand 7, single buffered']
    #allocation9 [shape = 's32[1]{0}', space=sflag, size = 0x4, scoped, tag = 'scoped memory for tpu_custom_call.1']
    #allocation10 [shape = 'u8[16384]{0}', space=vmem, size = 0x4000, scoped, tag = 'output window, operand 0, single buffered']
    %14 = vsyncpa [#allocation3], 0
    %15 = vsyncpa [#allocation6], 0
    %16 = vsyncpa [#allocation9], 0
    %17 = vsyncpa [#allocation4], 0
    // Predicated region
    $region2: #{tpu_custom_call.1} parent=1 // pred_check
      _
    $region3: #{tpu_custom_call.1} parent=1 // pred_check_branch
      %19 = sbr.rel (0) target = $region5
    $region4: #{tpu_custom_call.1} parent=1 // pred_region
      %s21 = ssub.s32 512, 512
      %22 = vsyncadd [#allocation3], %s21
      %s23 = sshll.u32 [#allocation2], 4
      %s24 = int_to_ptr.vmem [resolvable:$true] %s23
      %29 = dma.hbm_to_vmem [thread:$0]  %s0, 512, %s24, [#allocation3], 128, 128, 8
    $region5: #{tpu_custom_call.1} parent=1 // pred_fallthru
      _
    // Predicated region
    $region6: #{tpu_custom_call.1} parent=1 // pred_check
      _
    $region7: #{tpu_custom_call.1} parent=1 // pred_check_branch
      %31 = sbr.rel (0) target = $region9
    $region8: #{tpu_custom_call.1} parent=1 // pred_region
      %s33 = ssub.s32 512, 512
      %34 = vsyncadd [#allocation6], %s33
      %s35 = sshll.u32 [#allocation5], 4
      %s36 = int_to_ptr.vmem [resolvable:$true] %s35
      %41 = dma.hbm_to_vmem [thread:$0]  %s1, 512, %s36, [#allocation6], 128, 128, 8
    $region9: #{tpu_custom_call.1} parent=1 // pred_fallthru
      _
    // Predicated region
    $region10: #{tpu_custom_call.1} parent=1 // pred_check
      _
    $region11: #{tpu_custom_call.1} parent=1 // pred_check_branch
      %43 = sbr.rel (0) target = $region13
    $region12: #{tpu_custom_call.1} parent=1 // pred_region
      _
    $region13: #{tpu_custom_call.1} parent=1 // pred_fallthru
      _
    // Predicated region
    $region14: #{tpu_custom_call.1} parent=1 // pred_check
      _
    $region15: #{tpu_custom_call.1} parent=1 // pred_check_branch
      %45 = sbr.rel (0) target = $region17
    $region16: #{tpu_custom_call.1} parent=1 // pred_region
      _
    $region17: #{tpu_custom_call.1} parent=1 // pred_fallthru
      _
    // Predicated region
    $region18: #{tpu_custom_call.1} parent=1 // pred_check
      _
    $region19: #{tpu_custom_call.1} parent=1 // pred_check_branch
      %47 = sbr.rel (0) target = $region21
    $region20: #{tpu_custom_call.1} parent=1 // pred_region
      %s49 = ssub.s32 2048, 2048
      %50 = vsyncadd [#allocation6], %s49
      %s51 = sshll.u32 [#allocation7], 4
      %s52 = int_to_ptr.vmem [resolvable:$true] %s51
      %57 = dma.hbm_to_vmem [thread:$0]  %s4, 2048, %s52, [#allocation6], 128, 128, 8
    $region21: #{tpu_custom_call.1} parent=1 // pred_fallthru
      _
    // Predicated region
    $region22: #{tpu_custom_call.1} parent=1 // pred_check
      _
    $region23: #{tpu_custom_call.1} parent=1 // pred_check_branch
      %59 = sbr.rel (0) target = $region25
    $region24: #{tpu_custom_call.1} parent=1 // pred_region
      _
    $region25: #{tpu_custom_call.1} parent=1 // pred_fallthru
      _
    // Predicated region
    $region26: #{tpu_custom_call.1} parent=1 // pred_check
      _
    $region27: #{tpu_custom_call.1} parent=1 // pred_check_branch
      %61 = sbr.rel (0) target = $region29
    $region28: #{tpu_custom_call.1} parent=1 // pred_region
      _
    $region29: #{tpu_custom_call.1} parent=1 // pred_fallthru
      _
    // Predicated region
    $region30: #{tpu_custom_call.1} parent=1 // pred_check
      _
    $region31: #{tpu_custom_call.1} parent=1 // pred_check_branch
      %63 = sbr.rel (0) target = $region33
    $region32: #{tpu_custom_call.1} parent=1 // pred_region
      %s65 = ssub.s32 2048, 2048
      %66 = vsyncadd [#allocation9], %s65
      %s67 = sshll.u32 [#allocation8], 4
      %s68 = int_to_ptr.vmem [resolvable:$true] %s67
      %73 = dma.hbm_to_vmem [thread:$0]  %s7, 2048, %s68, [#allocation9], 128, 128, 8
    $region33: #{tpu_custom_call.1} parent=1 // pred_fallthru
      _
    // Predicated region
    $region34: #{tpu_custom_call.1} parent=1 // pred_check
      _
    $region35: #{tpu_custom_call.1} parent=1 // pred_check_branch
      %75 = sbr.rel (0) target = $region37
    $region36: #{tpu_custom_call.1} parent=1 // pred_region
      _
    $region37: #{tpu_custom_call.1} parent=1 // pred_fallthru
      _
    // Predicated region
    $region38: #{tpu_custom_call.1} parent=1 // pred_check
      _
    $region39: #{tpu_custom_call.1} parent=1 // pred_check_branch
      %77 = sbr.rel (0) target = $region41
    $region40: #{tpu_custom_call.1} parent=1 // pred_region
      %78 = dma.done [#allocation3], 512
    $region41: #{tpu_custom_call.1} parent=1 // pred_fallthru
      _
    // Predicated region
    $region42: #{tpu_custom_call.1} parent=1 // pred_check
      _
    $region43: #{tpu_custom_call.1} parent=1 // pred_check_branch
      %80 = sbr.rel (0) target = $region45
    $region44: #{tpu_custom_call.1} parent=1 // pred_region
      %81 = dma.done [#allocation6], 512
    $region45: #{tpu_custom_call.1} parent=1 // pred_fallthru
      _
    // Predicated region
    $region46: #{tpu_custom_call.1} parent=1 // pred_check
      _
    $region47: #{tpu_custom_call.1} parent=1 // pred_check_branch
      %83 = sbr.rel (0) target = $region49
    $region48: #{tpu_custom_call.1} parent=1 // pred_region
      %84 = dma.done [#allocation6], 2048
    $region49: #{tpu_custom_call.1} parent=1 // pred_fallthru
      _
    // Predicated region
    $region50: #{tpu_custom_call.1} parent=1 // pred_check
      _
    $region51: #{tpu_custom_call.1} parent=1 // pred_check_branch
      %86 = sbr.rel (0) target = $region53
    $region52: #{tpu_custom_call.1} parent=1 // pred_region
      %87 = dma.done [#allocation9], 2048
    $region53: #{tpu_custom_call.1} parent=1 // pred_fallthru
      _
    %v88 = vld [vmem:[#allocation2] sm:$0xff]
    %v89 = vld [vmem:[#allocation2 + $0x8] sm:$0xff]
    %v90 = vld [vmem:[#allocation2 + $0x10] sm:$0xff]
    %v91 = vld [vmem:[#allocation2 + $0x18] sm:$0xff]
    %v92 = vld [vmem:[#allocation5] sm:$0xff]
    %v93 = vld [vmem:[#allocation5 + $0x8] sm:$0xff]
    %v94 = vld [vmem:[#allocation5 + $0x10] sm:$0xff]
    %v95 = vld [vmem:[#allocation5 + $0x18] sm:$0xff]
    %v96 = vld [vmem:[%s2] sm:$0x1]
    %v97 = vld [vmem:[%s3] sm:$0x1]
    %vm98 = vcmask 261120
    %v100 = vsel %vm98, %v88, 0
    %v103 = vsel %vm98, %v89, 0
    %v106 = vsel %vm98, %v90, 0
    %v109 = vsel %vm98, %v91, 0
    %111 = vmatprep.subr.mxu0 0.0
    %112 = vmatpush1.msra.mxu0 0.0
    %113 = vmatprep.subr.mxu0 0.0
    %114 = vmatpush1.msra.mxu0 0.0
    %115 = vmatprep.subr.mxu0 0.0
    %116 = vmatpush1.msra.mxu0 0.0
    %117 = vmatprep.subr.mxu0 0.0
    %118 = vmatpush1.msra.mxu0 0.0
    %119 = vmatprep.subr.mxu0 0.0
    %120 = vmatpush1.msra.mxu0 0.0
    %121 = vmatprep.subr.mxu0 0.0
    %122 = vmatpush1.msra.mxu0 0.0
    %123 = vmatprep.subr.mxu0 0.0
    %124 = vmatpush1.msra.mxu0 0.0
    %125 = vmatprep.subr.mxu0 0.0
    %126 = vmatpush1.msra.mxu0 0.0
    %127 = vmatprep.subr.mxu0 0.0
    %128 = vmatpush1.msra.mxu0 0.0
    %129 = vmatprep.subr.mxu0 0.0
    %130 = vmatpush1.msra.mxu0 0.0
    %131 = vmatprep.subr.mxu0 0.0
    %132 = vmatpush1.msra.mxu0 0.0
    %133 = vmatprep.subr.mxu0 0.0
    %134 = vmatpush1.msra.mxu0 0.0
    %135 = vmatprep.subr.mxu0 0.0
    %136 = vmatpush1.msra.mxu0 %v95
    %137 = vmatprep.subr.mxu0 0.0
    %138 = vmatpush1.msra.mxu0 %v94
    %139 = vmatprep.subr.mxu0 0.0
    %140 = vmatpush1.msra.mxu0 %v93
    %141 = vmatprep.subr.mxu0 0.0
    %142 = vmatpush1.msra.mxu0 %v92
    %143 = vmatprep.subr.mxu0 0.0
    %144 = vmatpush2.msra.mxu0 0.0
    %145 = vmatprep.subr.mxu0 0.0
    %146 = vmatpush2.msra.mxu0 0.0
    %147 = vmatprep.subr.mxu0 0.0
    %148 = vmatpush2.msra.mxu0 0.0
    %149 = vmatprep.subr.mxu0 0.0
    %150 = vmatpush2.msra.mxu0 0.0
    %151 = vmatprep.subr.mxu0 0.0
    %152 = vmatpush2.msra.mxu0 0.0
    %153 = vmatprep.subr.mxu0 0.0
    %154 = vmatpush2.msra.mxu0 0.0
    %155 = vmatprep.subr.mxu0 0.0
    %156 = vmatpush2.msra.mxu0 0.0
    %157 = vmatprep.subr.mxu0 0.0
    %158 = vmatpush2.msra.mxu0 0.0
    %159 = vmatprep.subr.mxu0 0.0
    %160 = vmatpush2.msra.mxu0 0.0
    %161 = vmatprep.subr.mxu0 0.0
    %162 = vmatpush2.msra.mxu0 0.0
    %163 = vmatprep.subr.mxu0 0.0
    %164 = vmatpush2.msra.mxu0 0.0
    %165 = vmatprep.subr.mxu0 0.0
    %166 = vmatpush2.msra.mxu0 0.0
    %167 = vmatprep.subr.mxu0 0.0
    %168 = vmatpush2.msra.mxu0 0.0
    %169 = vmatprep.subr.mxu0 0.0
    %170 = vmatpush2.msra.mxu0 0.0
    %171 = vmatprep.subr.mxu0 0.0
    %172 = vmatpush2.msra.mxu0 0.0
    %173 = vmatprep.subr.mxu0 0.0
    %174 = vmatpush2.msra.mxu0 0.0
    %175 = vmatprep.mubr.f32.mxu0 0.0
    %176 = vmatmul.mubr.f32.gmra.mxu0 %v100
    %v177 = vpop.f32.mrf.mxu0
    %v178 = vadd.f32 0.0, %v177
    %v179 = vpop.f32.mrf.mxu0
    %180 = vmatprep.mubr.f32.mxu0 0.0
    %181 = vmatmul.mubr.f32.gmra.mxu0 %v103
    %v182 = vpop.f32.mrf.mxu0
    %v183 = vadd.f32 0.0, %v182
    %v184 = vpop.f32.mrf.mxu0
    %185 = vmatprep.mubr.f32.mxu0 0.0
    %186 = vmatmul.mubr.f32.gmra.mxu0 %v106
    %v187 = vpop.f32.mrf.mxu0
    %v188 = vadd.f32 0.0, %v187
    %v189 = vpop.f32.mrf.mxu0
    %190 = vmatprep.mubr.f32.mxu0 0.0
    %191 = vmatmul.mubr.f32.gmra.mxu0 %v109
    %v192 = vpop.f32.mrf.mxu0
    %v193 = vadd.f32 0.0, %v192
    %v194 = vpop.f32.mrf.mxu0
    %195 = vdwg.mxu0
    %v196 = vadd.f32 %v178, %v183
    %v197 = vadd.f32 %v196, %v188
    %v198 = vadd.f32 %v197, %v193
    %v199 = vrot.slane %v198, 4
    %v200 = vadd.f32 %v198, %v199
    %v201 = vrot.slane %v200, 2
    %v202 = vadd.f32 %v200, %v201
    %v203 = vrot.slane %v202, 1
    %v204 = vadd.f32 %v202, %v203
    %v205 = vmul.f32 %v204, 0.03125
    %v206 = vsub.f32 %v178, %v205
    %v207 = vsub.f32 %v183, %v205
    %v208 = vsub.f32 %v188, %v205
    %v209 = vsub.f32 %v193, %v205
    %v210 = vmul.f32 %v206, %v206
    %v211 = vmul.f32 %v207, %v207
    %v212 = vmul.f32 %v208, %v208
    %v213 = vmul.f32 %v209, %v209
    %v214 = vadd.f32 %v210, %v211
    %v215 = vadd.f32 %v214, %v212
    %v216 = vadd.f32 %v215, %v213
    %v217 = vrot.slane %v216, 4
    %v218 = vadd.f32 %v216, %v217
    %v219 = vrot.slane %v218, 2
    %v220 = vadd.f32 %v218, %v219
    %v221 = vrot.slane %v220, 1
    %v222 = vadd.f32 %v220, %v221
    %v223 = vmul.f32 %v222, 0.03125
    %v224 = vadd.f32 %v223, 1e-05
    %v225 = vrsqrt.pop %v224
    %v226 = vmul.f32 %v96, %v225
    %v228 = vlaneseq
    %v229 = vshrl.u32 %v228, 7
    %v230 = vsub.s32 0, %v229
    %v231 = vrot.slane %v226, %v230
    %v233 = vmul.f32 %v206, %v231
    %v234 = vmul.f32 %v207, %v231
    %v235 = vmul.f32 %v208, %v231
    %v236 = vmul.f32 %v209, %v231
    %v238 = vlaneseq
    %v239 = vshrl.u32 %v238, 7
    %v240 = vsub.s32 0, %v239
    %v241 = vrot.slane %v97, %v240
    %v243 = vadd.f32 %v233, %v241
    %v244 = vadd.f32 %v234, %v241
    %v245 = vadd.f32 %v235, %v241
    %v246 = vadd.f32 %v236, %v241
    %v247 = vmax.f32 %v243, 0.0
    %v248 = vmax.f32 %v244, 0.0
    %v249 = vmax.f32 %v245, 0.0
    %v250 = vmax.f32 %v246, 0.0
    %v251 = vld [vmem:[#allocation7] sm:$0xff]
    %v252 = vld [vmem:[#allocation7 + $0x8] sm:$0xff]
    %v253 = vld [vmem:[#allocation7 + $0x10] sm:$0xff]
    %v254 = vld [vmem:[#allocation7 + $0x18] sm:$0xff]
    %v255 = vld [vmem:[#allocation7 + $0x20] sm:$0xff]
    %v256 = vld [vmem:[#allocation7 + $0x28] sm:$0xff]
    %v257 = vld [vmem:[#allocation7 + $0x30] sm:$0xff]
    %v258 = vld [vmem:[#allocation7 + $0x38] sm:$0xff]
    %v259 = vld [vmem:[#allocation7 + $0x40] sm:$0xff]
    %v260 = vld [vmem:[#allocation7 + $0x48] sm:$0xff]
    %v261 = vld [vmem:[#allocation7 + $0x50] sm:$0xff]
    %v262 = vld [vmem:[#allocation7 + $0x58] sm:$0xff]
    %v263 = vld [vmem:[#allocation7 + $0x60] sm:$0xff]
    %v264 = vld [vmem:[#allocation7 + $0x68] sm:$0xff]
    %v265 = vld [vmem:[#allocation7 + $0x70] sm:$0xff]
    %v266 = vld [vmem:[#allocation7 + $0x78] sm:$0xff]
    %v267 = vld [vmem:[%s5] sm:$0x1]
    %v268 = vld [vmem:[%s6] sm:$0x1]
    %269 = vmatprep.subr.mxu0 0.0
    %270 = vmatpush1.msra.mxu0 %v266
    %271 = vmatprep.subr.mxu0 0.0
    %272 = vmatpush1.msra.mxu0 %v265
    %273 = vmatprep.subr.mxu0 0.0
    %274 = vmatpush1.msra.mxu0 %v264
    %275 = vmatprep.subr.mxu0 0.0
    %276 = vmatpush1.msra.mxu0 %v263
    %277 = vmatprep.subr.mxu0 0.0
    %278 = vmatpush1.msra.mxu0 %v262
    %279 = vmatprep.subr.mxu0 0.0
    %280 = vmatpush1.msra.mxu0 %v261
    %281 = vmatprep.subr.mxu0 0.0
    %282 = vmatpush1.msra.mxu0 %v260
    %283 = vmatprep.subr.mxu0 0.0
    %284 = vmatpush1.msra.mxu0 %v259
    %285 = vmatprep.subr.mxu0 0.0
    %286 = vmatpush1.msra.mxu0 %v258
    %287 = vmatprep.subr.mxu0 0.0
    %288 = vmatpush1.msra.mxu0 %v257
    %289 = vmatprep.subr.mxu0 0.0
    %290 = vmatpush1.msra.mxu0 %v256
    %291 = vmatprep.subr.mxu0 0.0
    %292 = vmatpush1.msra.mxu0 %v255
    %293 = vmatprep.subr.mxu0 0.0
    %294 = vmatpush1.msra.mxu0 %v254
    %295 = vmatprep.subr.mxu0 0.0
    %296 = vmatpush1.msra.mxu0 %v253
    %297 = vmatprep.subr.mxu0 0.0
    %298 = vmatpush1.msra.mxu0 %v252
    %299 = vmatprep.subr.mxu0 0.0
    %300 = vmatpush1.msra.mxu0 %v251
    %301 = vmatprep.subr.mxu0 0.0
    %302 = vmatpush2.msra.mxu0 0.0
    %303 = vmatprep.subr.mxu0 0.0
    %304 = vmatpush2.msra.mxu0 0.0
    %305 = vmatprep.subr.mxu0 0.0
    %306 = vmatpush2.msra.mxu0 0.0
    %307 = vmatprep.subr.mxu0 0.0
    %308 = vmatpush2.msra.mxu0 0.0
    %309 = vmatprep.subr.mxu0 0.0
    %310 = vmatpush2.msra.mxu0 0.0
    %311 = vmatprep.subr.mxu0 0.0
    %312 = vmatpush2.msra.mxu0 0.0
    %313 = vmatprep.subr.mxu0 0.0
    %314 = vmatpush2.msra.mxu0 0.0
    %315 = vmatprep.subr.mxu0 0.0
    %316 = vmatpush2.msra.mxu0 0.0
    %317 = vmatprep.subr.mxu0 0.0
    %318 = vmatpush2.msra.mxu0 0.0
    %319 = vmatprep.subr.mxu0 0.0
    %320 = vmatpush2.msra.mxu0 0.0
    %321 = vmatprep.subr.mxu0 0.0
    %322 = vmatpush2.msra.mxu0 0.0
    %323 = vmatprep.subr.mxu0 0.0
    %324 = vmatpush2.msra.mxu0 0.0
    %325 = vmatprep.subr.mxu0 0.0
    %326 = vmatpush2.msra.mxu0 0.0
    %327 = vmatprep.subr.mxu0 0.0
    %328 = vmatpush2.msra.mxu0 0.0
    %329 = vmatprep.subr.mxu0 0.0
    %330 = vmatpush2.msra.mxu0 0.0
    %331 = vmatprep.subr.mxu0 0.0
    %332 = vmatpush2.msra.mxu0 0.0
    %333 = vmatprep.mubr.f32.mxu0 0.0
    %334 = vmatmul.mubr.f32.gmra.mxu0 %v247
    %v335 = vpop.f32.mrf.mxu0
    %v336 = vadd.f32 0.0, %v335
    %v337 = vpop.f32.mrf.mxu0
    %338 = vmatprep.mubr.f32.mxu0 0.0
    %339 = vmatmul.mubr.f32.gmra.mxu0 %v248
    %v340 = vpop.f32.mrf.mxu0
    %v341 = vadd.f32 0.0, %v340
    %v342 = vpop.f32.mrf.mxu0
    %343 = vmatprep.mubr.f32.mxu0 0.0
    %344 = vmatmul.mubr.f32.gmra.mxu0 %v249
    %v345 = vpop.f32.mrf.mxu0
    %v346 = vadd.f32 0.0, %v345
    %v347 = vpop.f32.mrf.mxu0
    %348 = vmatprep.mubr.f32.mxu0 0.0
    %349 = vmatmul.mubr.f32.gmra.mxu0 %v250
    %v350 = vpop.f32.mrf.mxu0
    %v351 = vadd.f32 0.0, %v350
    %v352 = vpop.f32.mrf.mxu0
    %353 = vdwg.mxu0
    %v354 = vadd.f32 %v336, %v341
    %v355 = vadd.f32 %v354, %v346
    %v356 = vadd.f32 %v355, %v351
    %v357 = vrot.slane %v356, 4
    %v358 = vadd.f32 %v356, %v357
    %v359 = vrot.slane %v358, 2
    %v360 = vadd.f32 %v358, %v359
    %v361 = vrot.slane %v360, 1
    %v362 = vadd.f32 %v360, %v361
    %v363 = vmul.f32 %v362, 0.03125
    %v364 = vsub.f32 %v336, %v363
    %v365 = vsub.f32 %v341, %v363
    %v366 = vsub.f32 %v346, %v363
    %v367 = vsub.f32 %v351, %v363
    %v368 = vmul.f32 %v364, %v364
    %v369 = vmul.f32 %v365, %v365
    %v370 = vmul.f32 %v366, %v366
    %v371 = vmul.f32 %v367, %v367
    %v372 = vadd.f32 %v368, %v369
    %v373 = vadd.f32 %v372, %v370
    %v374 = vadd.f32 %v373, %v371
    %v375 = vrot.slane %v374, 4
    %v376 = vadd.f32 %v374, %v375
    %v377 = vrot.slane %v376, 2
    %v378 = vadd.f32 %v376, %v377
    %v379 = vrot.slane %v378, 1
    %v380 = vadd.f32 %v378, %v379
    %v381 = vmul.f32 %v380, 0.03125
    %v382 = vadd.f32 %v381, 1e-05
    %v383 = vrsqrt.pop %v382
    %v384 = vmul.f32 %v267, %v383
    %v386 = vlaneseq
    %v387 = vshrl.u32 %v386, 7
    %v388 = vsub.s32 0, %v387
    %v389 = vrot.slane %v384, %v388
    %v391 = vmul.f32 %v364, %v389
    %v392 = vmul.f32 %v365, %v389
    %v393 = vmul.f32 %v366, %v389
    %v394 = vmul.f32 %v367, %v389
    %v396 = vlaneseq
    %v397 = vshrl.u32 %v396, 7
    %v398 = vsub.s32 0, %v397
    %v399 = vrot.slane %v268, %v398
    %v401 = vadd.f32 %v391, %v399
    %v402 = vadd.f32 %v392, %v399
    %v403 = vadd.f32 %v393, %v399
    %v404 = vadd.f32 %v394, %v399
    %v405 = vmax.f32 %v401, 0.0
    %v406 = vmax.f32 %v402, 0.0
    %v407 = vmax.f32 %v403, 0.0
    %v408 = vmax.f32 %v404, 0.0
    %v409 = vld [vmem:[#allocation8] sm:$0xff]
    %v410 = vld [vmem:[#allocation8 + $0x8] sm:$0xff]
    %v411 = vld [vmem:[#allocation8 + $0x10] sm:$0xff]
    %v412 = vld [vmem:[#allocation8 + $0x18] sm:$0xff]
    %v413 = vld [vmem:[#allocation8 + $0x20] sm:$0xff]
    %v414 = vld [vmem:[#allocation8 + $0x28] sm:$0xff]
    %v415 = vld [vmem:[#allocation8 + $0x30] sm:$0xff]
    %v416 = vld [vmem:[#allocation8 + $0x38] sm:$0xff]
    %v417 = vld [vmem:[#allocation8 + $0x40] sm:$0xff]
    %v418 = vld [vmem:[#allocation8 + $0x48] sm:$0xff]
    %v419 = vld [vmem:[#allocation8 + $0x50] sm:$0xff]
    %v420 = vld [vmem:[#allocation8 + $0x58] sm:$0xff]
    %v421 = vld [vmem:[#allocation8 + $0x60] sm:$0xff]
    %v422 = vld [vmem:[#allocation8 + $0x68] sm:$0xff]
    %v423 = vld [vmem:[#allocation8 + $0x70] sm:$0xff]
    %v424 = vld [vmem:[#allocation8 + $0x78] sm:$0xff]
    %v425 = vld [vmem:[%s8] sm:$0x1]
    %v427 = vlaneseq
    %v428 = vshrl.u32 %v427, 7
    %v429 = vsub.s32 0, %v428
    %v430 = vrot.slane %v425, %v429
    %432 = vmatprep.subr.mxu0 0.0
    %433 = vmatpush1.msra.mxu0 %v424
    %434 = vmatprep.subr.mxu0 0.0
    %435 = vmatpush1.msra.mxu0 %v423
    %436 = vmatprep.subr.mxu0 0.0
    %437 = vmatpush1.msra.mxu0 %v422
    %438 = vmatprep.subr.mxu0 0.0
    %439 = vmatpush1.msra.mxu0 %v421
    %440 = vmatprep.subr.mxu0 0.0
    %441 = vmatpush1.msra.mxu0 %v420
    %442 = vmatprep.subr.mxu0 0.0
    %443 = vmatpush1.msra.mxu0 %v419
    %444 = vmatprep.subr.mxu0 0.0
    %445 = vmatpush1.msra.mxu0 %v418
    %446 = vmatprep.subr.mxu0 0.0
    %447 = vmatpush1.msra.mxu0 %v417
    %448 = vmatprep.subr.mxu0 0.0
    %449 = vmatpush1.msra.mxu0 %v416
    %450 = vmatprep.subr.mxu0 0.0
    %451 = vmatpush1.msra.mxu0 %v415
    %452 = vmatprep.subr.mxu0 0.0
    %453 = vmatpush1.msra.mxu0 %v414
    %454 = vmatprep.subr.mxu0 0.0
    %455 = vmatpush1.msra.mxu0 %v413
    %456 = vmatprep.subr.mxu0 0.0
    %457 = vmatpush1.msra.mxu0 %v412
    %458 = vmatprep.subr.mxu0 0.0
    %459 = vmatpush1.msra.mxu0 %v411
    %460 = vmatprep.subr.mxu0 0.0
    %461 = vmatpush1.msra.mxu0 %v410
    %462 = vmatprep.subr.mxu0 0.0
    %463 = vmatpush1.msra.mxu0 %v409
    %464 = vmatprep.subr.mxu0 0.0
    %465 = vmatpush2.msra.mxu0 0.0
    %466 = vmatprep.subr.mxu0 0.0
    %467 = vmatpush2.msra.mxu0 0.0
    %468 = vmatprep.subr.mxu0 0.0
    %469 = vmatpush2.msra.mxu0 0.0
    %470 = vmatprep.subr.mxu0 0.0
    %471 = vmatpush2.msra.mxu0 0.0
    %472 = vmatprep.subr.mxu0 0.0
    %473 = vmatpush2.msra.mxu0 0.0
    %474 = vmatprep.subr.mxu0 0.0
    %475 = vmatpush2.msra.mxu0 0.0
    %476 = vmatprep.subr.mxu0 0.0
    %477 = vmatpush2.msra.mxu0 0.0
    %478 = vmatprep.subr.mxu0 0.0
    %479 = vmatpush2.msra.mxu0 0.0
    %480 = vmatprep.subr.mxu0 0.0
    %481 = vmatpush2.msra.mxu0 0.0
    %482 = vmatprep.subr.mxu0 0.0
    %483 = vmatpush2.msra.mxu0 0.0
    %484 = vmatprep.subr.mxu0 0.0
    %485 = vmatpush2.msra.mxu0 0.0
    %486 = vmatprep.subr.mxu0 0.0
    %487 = vmatpush2.msra.mxu0 0.0
    %488 = vmatprep.subr.mxu0 0.0
    %489 = vmatpush2.msra.mxu0 0.0
    %490 = vmatprep.subr.mxu0 0.0
    %491 = vmatpush2.msra.mxu0 0.0
    %492 = vmatprep.subr.mxu0 0.0
    %493 = vmatpush2.msra.mxu0 0.0
    %494 = vmatprep.subr.mxu0 0.0
    %495 = vmatpush2.msra.mxu0 0.0
    %496 = vmatprep.mubr.f32.mxu0 0.0
    %497 = vmatmul.mubr.f32.gmra.mxu0 %v405
    %v498 = vpop.f32.mrf.mxu0
    %v499 = vadd.f32 %v430, %v498
    %v500 = vpop.f32.mrf.mxu0
    %501 = vmatprep.mubr.f32.mxu0 0.0
    %502 = vmatmul.mubr.f32.gmra.mxu0 %v406
    %v503 = vpop.f32.mrf.mxu0
    %v504 = vadd.f32 %v430, %v503
    %v505 = vpop.f32.mrf.mxu0
    %506 = vmatprep.mubr.f32.mxu0 0.0
    %507 = vmatmul.mubr.f32.gmra.mxu0 %v407
    %v508 = vpop.f32.mrf.mxu0
    %v509 = vadd.f32 %v430, %v508
    %v510 = vpop.f32.mrf.mxu0
    %511 = vmatprep.mubr.f32.mxu0 0.0
    %512 = vmatmul.mubr.f32.gmra.mxu0 %v408
    %v513 = vpop.f32.mrf.mxu0
    %v514 = vadd.f32 %v430, %v513
    %v515 = vpop.f32.mrf.mxu0
    %516 = vdwg.mxu0
    %517 = vst [vmem:[#allocation10] sm:$0xff] %v499
    %518 = vst [vmem:[#allocation10 + $0x8] sm:$0xff] %v504
    %519 = vst [vmem:[#allocation10 + $0x10] sm:$0xff] %v509
    %520 = vst [vmem:[#allocation10 + $0x18] sm:$0xff] %v514
    // Predicated region
    $region54: #{tpu_custom_call.1} parent=1 // pred_check
      _
    $region55: #{tpu_custom_call.1} parent=1 // pred_check_branch
      %522 = sbr.rel (0) target = $region57
    $region56: #{tpu_custom_call.1} parent=1 // pred_region
      %s524 = ssub.s32 512, 512
      %525 = vsyncadd [#allocation4], %s524
      %s526 = sshll.u32 [#allocation10], 4
      %s527 = int_to_ptr.vmem [resolvable:$true] %s526
      %532 = dma.vmem_to_hbm [thread:$0]  %s527, 512, %s9, [#allocation4], 128, 128, 8
    $region57: #{tpu_custom_call.1} parent=1 // pred_fallthru
      _
    // Predicated region
    $region58: #{tpu_custom_call.1} parent=1 // pred_check
      _
    $region59: #{tpu_custom_call.1} parent=1 // pred_check_branch
      %534 = sbr.rel (0) target = $region61
    $region60: #{tpu_custom_call.1} parent=1 // pred_region
      %535 = dma.done [#allocation4], 512
    $region61: #{tpu_custom_call.1} parent=1 // pred_fallthru
      _
    %536 = vsyncpa [#allocation3], 1
    %537 = vsyncpa [#allocation6], 1
    %538 = vsyncpa [#allocation9], 1
    %539 = vsyncpa [#allocation4], 1

</llo_original>
